<compile_context>
chip_gen: v7x
topology: tpu7x:2x2x1
jax: 0.10.0
libtpu: 0.0.40
codegen_flags: <defaults>
</compile_context>

<pallas_src>
import numpy as np
import jax
import jax.numpy as jnp
from jax import lax
from jax.experimental import pallas as pl
from jax.experimental.pallas import tpu as pltpu

# ----------------------------- config ---------------------------------------
BATCH = 2
IMAGE_DIM = 16
IN_CH = 3
CONV_CH = 4
KSIZE = 3
STRIDE = 4
PAD = KSIZE // 2          # 1
OUT_PAD = 3               # hard-coded in the module
ENC_DIM = 32

DIM_CONV1 = (IMAGE_DIM - KSIZE + 2 * PAD + STRIDE) // STRIDE           # 4
DIM_FC1 = CONV_CH * DIM_CONV1 * DIM_CONV1                              # 64
OUT_DIM = (DIM_CONV1 - 1) * STRIDE - 2 * PAD + KSIZE + OUT_PAD         # 16
IN_FEAT = IN_CH * IMAGE_DIM * IMAGE_DIM                                # 768
OUT_FEAT = IN_CH * OUT_DIM * OUT_DIM                                   # 768

# TODO(synk): the sampling_scale (MaxPool2d / UpsamplingNearest2d) branch is not
# implemented; the default forward path (sampling_scale=None) is what runs here.


# ------------------------- fused Pallas kernel -------------------------------
def _fused_forward_kernel(x_ref, g1_ref, b1_ref, g2_ref, b2_ref,
                          g3_ref, b3_ref, g4_ref, b4_ref, o_ref):
    """One batch element per grid step. Everything stays in VMEM/vregs."""
    x = x_ref[0]                                                    # (1, 768)

    # Conv2d(3->C, k=3, s=4, p=1) + flatten, folded into G1, then ReLU.
    h = jnp.dot(x, g1_ref[...], preferred_element_type=jnp.float32) + b1_ref[...]
    h = jnp.maximum(h, 0.0)                                         # (1, 64)

    # encoder Linear(64 -> 32) + ReLU
    h = jnp.dot(h, g2_ref[...], preferred_element_type=jnp.float32) + b2_ref[...]
    h = jnp.maximum(h, 0.0)                                         # (1, 32)

    # decoder Linear(32 -> 64) + ReLU
    h = jnp.dot(h, g3_ref[...], preferred_element_type=jnp.float32) + b3_ref[...]
    h = jnp.maximum(h, 0.0)                                         # (1, 64)

    # Unflatten + ConvTranspose2d(C->3, k=3, s=4, p=1, output_padding=3),
    # folded into G4 (direct col2im as a dense linear map — no zero dilation).
    y = jnp.dot(h, g4_ref[...], preferred_element_type=jnp.float32) + b4_ref[...]

    # Sigmoid: exp on the EUP, approx reciprocal keeps the divide off the VPU.
    o_ref[0] = pl.reciprocal(1.0 + jnp.exp(-y), approx=True).astype(o_ref.dtype)


def autoencoder_forward(x_nchw, packed):
    """x_nchw: (B, 3, 16, 16) float32.  packed: pre-folded parameters."""
    B = x_nchw.shape[0]
    # NCHW row-major flatten == (c, h, w) ordering -> exactly the layout G1 expects.
    x_rows = x_nchw.reshape(B, 1, IN_FEAT).astype(jnp.float32)

    out_rows = pl.pallas_call(
        _fused_forward_kernel,
        out_shape=jax.ShapeDtypeStruct((B, 1, OUT_FEAT), jnp.float32),
        grid=(B,),
        in_specs=[
            pl.BlockSpec((1, 1, IN_FEAT), lambda b: (b, 0, 0)),       # x row
            pl.BlockSpec((IN_FEAT, DIM_FC1), lambda b: (0, 0)),       # G1
            pl.BlockSpec((1, DIM_FC1), lambda b: (0, 0)),             # b1
            pl.BlockSpec((DIM_FC1, ENC_DIM), lambda b: (0, 0)),       # G2
            pl.BlockSpec((1, ENC_DIM), lambda b: (0, 0)),             # b2
            pl.BlockSpec((ENC_DIM, DIM_FC1), lambda b: (0, 0)),       # G3
            pl.BlockSpec((1, DIM_FC1), lambda b: (0, 0)),             # b3
            pl.BlockSpec((DIM_FC1, OUT_FEAT), lambda b: (0, 0)),      # G4
            pl.BlockSpec((1, OUT_FEAT), lambda b: (0, 0)),            # b4
        ],
        out_specs=pl.BlockSpec((1, 1, OUT_FEAT), lambda b: (b, 0, 0)),
        compiler_params=pltpu.CompilerParams(
            dimension_semantics=("parallel",)),   # shards over both TCs on v7x
    )(x_rows, packed["g1"], packed["b1"], packed["g2"], packed["b2"],
      packed["g3"], packed["b3"], packed["g4"], packed["b4"])

    return out_rows.reshape(B, IN_CH, OUT_DIM, OUT_DIM)


# ----------------------- parameter init & packing ----------------------------
def init_params(key):
    ks = jax.random.split(key, 8)

    def u(k_, shape, fan_in):
        bound = 1.0 / jnp.sqrt(float(fan_in))
        return jax.random.uniform(k_, shape, jnp.float32, -bound, bound)

    return {
        "enc_conv_w": u(ks[0], (CONV_CH, IN_CH, KSIZE, KSIZE), IN_CH * KSIZE * KSIZE),
        "enc_conv_b": u(ks[1], (CONV_CH,), IN_CH * KSIZE * KSIZE),
        "enc_fc_w": u(ks[2], (ENC_DIM, DIM_FC1), DIM_FC1),
        "enc_fc_b": u(ks[3], (ENC_DIM,), DIM_FC1),
        "dec_fc_w": u(ks[4], (DIM_FC1, ENC_DIM), ENC_DIM),
        "dec_fc_b": u(ks[5], (DIM_FC1,), ENC_DIM),
        # ConvTranspose2d weight layout: (in_channels, out_channels, kH, kW)
        "dec_conv_w": u(ks[6], (CONV_CH, IN_CH, KSIZE, KSIZE), CONV_CH * KSIZE * KSIZE),
        "dec_conv_b": u(ks[7], (IN_CH,), CONV_CH * KSIZE * KSIZE),
    }


def pack_params(params):
    """One-time (outside jit) folding of conv / deconv / flatten into dense mats."""
    w1 = np.asarray(params["enc_conv_w"], dtype=np.float32)   # (C, 3, k, k)
    b1 = np.asarray(params["enc_conv_b"], dtype=np.float32)   # (C,)
    wt = np.asarray(params["dec_conv_w"], dtype=np.float32)   # (C, 3, k, k)
    bt = np.asarray(params["dec_conv_b"], dtype=np.float32)   # (3,)

    HW = IMAGE_DIM * IMAGE_DIM
    OHW = OUT_DIM * OUT_DIM

    # --- G1: x_flat[cin*HW + h*W + w] -> conv+flatten pre-activation[c*16+i*4+j]
    g1 = np.zeros((IN_FEAT, DIM_FC1), np.float32)
    b1row = np.zeros((DIM_FC1,), np.float32)
    for c in range(CONV_CH):
        for i in range(DIM_CONV1):
            for j in range(DIM_CONV1):
                q = c * DIM_CONV1 * DIM_CONV1 + i * DIM_CONV1 + j
                b1row[q] = b1[c]
                for cin in range(IN_CH):
                    for kh in range(KSIZE):
                        for kw in range(KSIZE):
                            hh = STRIDE * i + kh - PAD
                            ww = STRIDE * j + kw - PAD
                            if 0 <= hh < IMAGE_DIM and 0 <= ww < IMAGE_DIM:
                                g1[cin * HW + hh * IMAGE_DIM + ww, q] += w1[c, cin, kh, kw]

    # --- G4: dec_flat[c*16+i*4+j] -> ConvTranspose logits[co*OHW + oh*OD + ow]
    g4 = np.zeros((DIM_FC1, OUT_FEAT), np.float32)
    b4row = np.zeros((OUT_FEAT,), np.float32)
    for co in range(IN_CH):
        b4row[co * OHW:(co + 1) * OHW] = bt[co]
    for c in range(CONV_CH):
        for i in range(DIM_CONV1):
            for j in range(DIM_CONV1):
                p = c * DIM_CONV1 * DIM_CONV1 + i * DIM_CONV1 + j
                for co in range(IN_CH):
                    for kh in range(KSIZE):
                        for kw in range(KSIZE):
                            oh = STRIDE * i + kh - PAD
                            ow = STRIDE * j + kw - PAD
                            if 0 <= oh < OUT_DIM and 0 <= ow < OUT_DIM:
                                g4[p, co * OHW + oh * OUT_DIM + ow] += wt[c, co, kh, kw]

    return {
        "g1": jnp.asarray(g1),
        "b1": jnp.asarray(b1row).reshape(1, DIM_FC1),
        "g2": jnp.asarray(params["enc_fc_w"]).T.astype(jnp.float32),       # (64, 32)
        "b2": jnp.asarray(params["enc_fc_b"]).reshape(1, ENC_DIM).astype(jnp.float32),
        "g3": jnp.asarray(params["dec_fc_w"]).T.astype(jnp.float32),       # (32, 64)
        "b3": jnp.asarray(params["dec_fc_b"]).reshape(1, DIM_FC1).astype(jnp.float32),
        "g4": jnp.asarray(g4),
        "b4": jnp.asarray(b4row).reshape(1, OUT_FEAT),
    }


# ------------------------- pure-JAX reference --------------------------------
def reference_forward(x, params):
    dn = ("NCHW", "OIHW", "NCHW")
    # encoder conv + ReLU
    y = lax.conv_general_dilated(x, params["enc_conv_w"], window_strides=(STRIDE, STRIDE),
                                 padding=((PAD, PAD), (PAD, PAD)), dimension_numbers=dn)
    y = jax.nn.relu(y + params["enc_conv_b"].reshape(1, -1, 1, 1))
    # flatten (PyTorch (C,H,W) order) + FCs
    flat = y.reshape(x.shape[0], -1)
    enc = jax.nn.relu(flat @ params["enc_fc_w"].T + params["enc_fc_b"])
    dec = jax.nn.relu(enc @ params["dec_fc_w"].T + params["dec_fc_b"])
    d = dec.reshape(x.shape[0], CONV_CH, DIM_CONV1, DIM_CONV1)
    # ConvTranspose2d as lhs-dilated conv with flipped / channel-swapped weight
    w_eq = jnp.transpose(jnp.flip(params["dec_conv_w"], axis=(2, 3)), (1, 0, 2, 3))
    pad_lo = KSIZE - 1 - PAD
    pad_hi = KSIZE - 1 - PAD + OUT_PAD
    out = lax.conv_general_dilated(d, w_eq, window_strides=(1, 1),
                                   padding=((pad_lo, pad_hi), (pad_lo, pad_hi)),
                                   lhs_dilation=(STRIDE, STRIDE), dimension_numbers=dn)
    return jax.nn.sigmoid(out + params["dec_conv_b"].reshape(1, -1, 1, 1))


# --------------------------------- main ---------------------------------------
if __name__ == "__main__":
    key = jax.random.PRNGKey(0)
    k_x, k_p = jax.random.split(key)
    x = jax.random.uniform(k_x, (BATCH, IN_CH, IMAGE_DIM, IMAGE_DIM), jnp.float32)
    params = init_params(k_p)
    packed = pack_params(params)          # one-time weight folding, outside jit

    fwd = jax.jit(autoencoder_forward)
    out = jax.block_until_ready(fwd(x, packed))

    assert out.shape == (BATCH, IN_CH, OUT_DIM, OUT_DIM), out.shape
    ref = reference_forward(x, params)
    assert bool(jnp.allclose(out, ref, atol=5e-3, rtol=5e-3))
    print("KERNEL_OK")
</pallas_src>

<mosaic_0001>
module attributes {stable_mosaic.version = 11 : i64} {
  func.func @_fused_forward_kernel(%arg0: i32, %arg1: memref<1x1x768xf32, #tpu.memory_space<vmem>>, %arg2: memref<768x64xf32, #tpu.memory_space<vmem>>, %arg3: memref<1x64xf32, #tpu.memory_space<vmem>>, %arg4: memref<64x32xf32, #tpu.memory_space<vmem>>, %arg5: memref<1x32xf32, #tpu.memory_space<vmem>>, %arg6: memref<32x64xf32, #tpu.memory_space<vmem>>, %arg7: memref<1x64xf32, #tpu.memory_space<vmem>>, %arg8: memref<64x768xf32, #tpu.memory_space<vmem>>, %arg9: memref<1x768xf32, #tpu.memory_space<vmem>>, %arg10: memref<1x1x768xf32, #tpu.memory_space<vmem>>) attributes {dimension_semantics = [#tpu.dimension_semantics<parallel>], iteration_bounds = array<i64: 2>, scalar_prefetch = 0 : i64, scratch_operands = 0 : i64, tpu.core_type = #tpu.core_type<tc>, window_params = [{transform_indices = @transform_0, window_bounds = array<i64: 1, 1, 768>}, {pipeline_mode = #tpu.pipeline_mode<synchronous>, transform_indices = @transform_1, window_bounds = array<i64: 768, 64>}, {pipeline_mode = #tpu.pipeline_mode<synchronous>, transform_indices = @transform_2, window_bounds = array<i64: 1, 64>}, {pipeline_mode = #tpu.pipeline_mode<synchronous>, transform_indices = @transform_3, window_bounds = array<i64: 64, 32>}, {pipeline_mode = #tpu.pipeline_mode<synchronous>, transform_indices = @transform_4, window_bounds = array<i64: 1, 32>}, {pipeline_mode = #tpu.pipeline_mode<synchronous>, transform_indices = @transform_5, window_bounds = array<i64: 32, 64>}, {pipeline_mode = #tpu.pipeline_mode<synchronous>, transform_indices = @transform_6, window_bounds = array<i64: 1, 64>}, {pipeline_mode = #tpu.pipeline_mode<synchronous>, transform_indices = @transform_7, window_bounds = array<i64: 64, 768>}, {pipeline_mode = #tpu.pipeline_mode<synchronous>, transform_indices = @transform_8, window_bounds = array<i64: 1, 768>}, {transform_indices = @transform_9, window_bounds = array<i64: 1, 1, 768>}]} {
    %c0 = arith.constant 0 : index
    %c0_0 = arith.constant 0 : index
    %c0_1 = arith.constant 0 : index
    %0 = vector.load %arg1[%c0, %c0_0, %c0_1] : memref<1x1x768xf32, #tpu.memory_space<vmem>>, vector<1x1x768xf32>
    %1 = vector.shape_cast %0 : vector<1x1x768xf32> to vector<1x768xf32>
    %c0_2 = arith.constant 0 : index
    %c0_3 = arith.constant 0 : index
    %2 = vector.load %arg2[%c0_2, %c0_3] : memref<768x64xf32, #tpu.memory_space<vmem>>, vector<768x64xf32>
    %cst = arith.constant dense<0.000000e+00> : vector<1x64xf32>
    %3 = tpu.matmul %1, %2, %cst {dimension_numbers = #tpu.dot_dimension_numbers<[1], [0], [0], [1], [0, 0, 1, 1], [], []>} : vector<1x768xf32>, vector<768x64xf32>, vector<1x64xf32> -> vector<1x64xf32>
    %c0_4 = arith.constant 0 : index
    %c0_5 = arith.constant 0 : index
    %4 = vector.load %arg3[%c0_4, %c0_5] : memref<1x64xf32, #tpu.memory_space<vmem>>, vector<1x64xf32>
    %5 = arith.addf %3, %4 : vector<1x64xf32>
    %cst_6 = arith.constant 0.000000e+00 : f32
    %6 = vector.broadcast %cst_6 : f32 to vector<1x64xf32>
    %7 = arith.maximumf %5, %6 : vector<1x64xf32>
    %c0_7 = arith.constant 0 : index
    %c0_8 = arith.constant 0 : index
    %8 = vector.load %arg4[%c0_7, %c0_8] : memref<64x32xf32, #tpu.memory_space<vmem>>, vector<64x32xf32>
    %cst_9 = arith.constant dense<0.000000e+00> : vector<1x32xf32>
    %9 = tpu.matmul %7, %8, %cst_9 {dimension_numbers = #tpu.dot_dimension_numbers<[1], [0], [0], [1], [0, 0, 1, 1], [], []>} : vector<1x64xf32>, vector<64x32xf32>, vector<1x32xf32> -> vector<1x32xf32>
    %c0_10 = arith.constant 0 : index
    %c0_11 = arith.constant 0 : index
    %10 = vector.load %arg5[%c0_10, %c0_11] : memref<1x32xf32, #tpu.memory_space<vmem>>, vector<1x32xf32>
    %11 = arith.addf %9, %10 : vector<1x32xf32>
    %cst_12 = arith.constant 0.000000e+00 : f32
    %12 = vector.broadcast %cst_12 : f32 to vector<1x32xf32>
    %13 = arith.maximumf %11, %12 : vector<1x32xf32>
    %c0_13 = arith.constant 0 : index
    %c0_14 = arith.constant 0 : index
    %14 = vector.load %arg6[%c0_13, %c0_14] : memref<32x64xf32, #tpu.memory_space<vmem>>, vector<32x64xf32>
    %cst_15 = arith.constant dense<0.000000e+00> : vector<1x64xf32>
    %15 = tpu.matmul %13, %14, %cst_15 {dimension_numbers = #tpu.dot_dimension_numbers<[1], [0], [0], [1], [0, 0, 1, 1], [], []>} : vector<1x32xf32>, vector<32x64xf32>, vector<1x64xf32> -> vector<1x64xf32>
    %c0_16 = arith.constant 0 : index
    %c0_17 = arith.constant 0 : index
    %16 = vector.load %arg7[%c0_16, %c0_17] : memref<1x64xf32, #tpu.memory_space<vmem>>, vector<1x64xf32>
    %17 = arith.addf %15, %16 : vector<1x64xf32>
    %cst_18 = arith.constant 0.000000e+00 : f32
    %18 = vector.broadcast %cst_18 : f32 to vector<1x64xf32>
    %19 = arith.maximumf %17, %18 : vector<1x64xf32>
    %c0_19 = arith.constant 0 : index
    %c0_20 = arith.constant 0 : index
    %20 = vector.load %arg8[%c0_19, %c0_20] : memref<64x768xf32, #tpu.memory_space<vmem>>, vector<64x768xf32>
    %cst_21 = arith.constant dense<0.000000e+00> : vector<1x768xf32>
    %21 = tpu.matmul %19, %20, %cst_21 {dimension_numbers = #tpu.dot_dimension_numbers<[1], [0], [0], [1], [0, 0, 1, 1], [], []>} : vector<1x64xf32>, vector<64x768xf32>, vector<1x768xf32> -> vector<1x768xf32>
    %c0_22 = arith.constant 0 : index
    %c0_23 = arith.constant 0 : index
    %22 = vector.load %arg9[%c0_22, %c0_23] : memref<1x768xf32, #tpu.memory_space<vmem>>, vector<1x768xf32>
    %23 = arith.addf %21, %22 : vector<1x768xf32>
    %cst_24 = arith.constant 0.000000e+00 : f32
    %24 = vector.broadcast %cst_24 : f32 to vector<1x768xf32>
    %25 = arith.subf %24, %23 : vector<1x768xf32>
    %26 = math.exp %25 : vector<1x768xf32>
    %cst_25 = arith.constant 1.000000e+00 : f32
    %27 = vector.broadcast %cst_25 : f32 to vector<1x768xf32>
    %28 = arith.addf %27, %26 : vector<1x768xf32>
    %29 = tpu.reciprocal %28 {approx = true} : vector<1x768xf32> -> vector<1x768xf32>
    %c0_26 = arith.constant 0 : index
    %c0_27 = arith.constant 0 : index
    %c0_28 = arith.constant 0 : index
    %30 = vector.load %arg10[%c0_26, %c0_27, %c0_28] : memref<1x1x768xf32, #tpu.memory_space<vmem>>, vector<1x1x768xf32>
    %31 = vector.shape_cast %30 : vector<1x1x768xf32> to vector<1x768xf32>
    %32 = vector.shape_cast %29 : vector<1x768xf32> to vector<1x1x768xf32>
    tpu.vector_store %arg10[%c0_26, %c0_27, %c0_28], %32 {strides = array<i32>} : memref<1x1x768xf32, #tpu.memory_space<vmem>>, vector<1x1x768xf32>,
    return
  }
  func.func @transform_0(%arg0: i32) -> (i32, i32, i32) {
    %c0_i32 = arith.constant 0 : i32
    %c0_i32_0 = arith.constant 0 : i32
    %c0_i32_1 = arith.constant 0 : i32
    return %arg0, %c0_i32, %c0_i32_0 : i32, i32, i32
  }
  func.func @transform_1(%arg0: i32) -> (i32, i32) {
    %c0_i32 = arith.constant 0 : i32
    %c0_i32_0 = arith.constant 0 : i32
    %c0_i32_1 = arith.constant 0 : i32
    return %c0_i32, %c0_i32_0 : i32, i32
  }
  func.func @transform_2(%arg0: i32) -> (i32, i32) {
    %c0_i32 = arith.constant 0 : i32
    %c0_i32_0 = arith.constant 0 : i32
    %c0_i32_1 = arith.constant 0 : i32
    return %c0_i32, %c0_i32_0 : i32, i32
  }
  func.func @transform_3(%arg0: i32) -> (i32, i32) {
    %c0_i32 = arith.constant 0 : i32
    %c0_i32_0 = arith.constant 0 : i32
    %c0_i32_1 = arith.constant 0 : i32
    return %c0_i32, %c0_i32_0 : i32, i32
  }
  func.func @transform_4(%arg0: i32) -> (i32, i32) {
    %c0_i32 = arith.constant 0 : i32
    %c0_i32_0 = arith.constant 0 : i32
    %c0_i32_1 = arith.constant 0 : i32
    return %c0_i32, %c0_i32_0 : i32, i32
  }
  func.func @transform_5(%arg0: i32) -> (i32, i32) {
    %c0_i32 = arith.constant 0 : i32
    %c0_i32_0 = arith.constant 0 : i32
    %c0_i32_1 = arith.constant 0 : i32
    return %c0_i32, %c0_i32_0 : i32, i32
  }
  func.func @transform_6(%arg0: i32) -> (i32, i32) {
    %c0_i32 = arith.constant 0 : i32
    %c0_i32_0 = arith.constant 0 : i32
    %c0_i32_1 = arith.constant 0 : i32
    return %c0_i32, %c0_i32_0 : i32, i32
  }
  func.func @transform_7(%arg0: i32) -> (i32, i32) {
    %c0_i32 = arith.constant 0 : i32
    %c0_i32_0 = arith.constant 0 : i32
    %c0_i32_1 = arith.constant 0 : i32
    return %c0_i32, %c0_i32_0 : i32, i32
  }
  func.func @transform_8(%arg0: i32) -> (i32, i32) {
    %c0_i32 = arith.constant 0 : i32
    %c0_i32_0 = arith.constant 0 : i32
    %c0_i32_1 = arith.constant 0 : i32
    return %c0_i32, %c0_i32_0 : i32, i32
  }
  func.func @transform_9(%arg0: i32) -> (i32, i32, i32) {
    %c0_i32 = arith.constant 0 : i32
    %c0_i32_0 = arith.constant 0 : i32
    %c0_i32_1 = arith.constant 0 : i32
    return %arg0, %c0_i32, %c0_i32_0 : i32, i32, i32
  }
}

</mosaic_0001>

<llo_original>
// kernel: autoencoder_forward.1
$region0: #{autoencoder_forward.1}
  #allocation0 [shape = 'u32[]', space=smem, size = 0x4, offset = 0x4, fixed_abs, tag = 'smem constant byte address 0x4 - core index']
  #allocation1 [shape = 'u32[144,128]{1,0:T(1,128)}', space=vmem, size = 0x12000, scoped, tag = 'internal scratch']
  %s0 = inlined_call_operand.vmem [shape: f32[2,1,768], index: 0, kind: input, shape index: {}]
  %s1 = inlined_call_operand.vmem [shape: f32[768,64], index: 1, kind: input, shape index: {}]
  %s2 = inlined_call_operand.vmem [shape: f32[1,64], index: 2, kind: input, shape index: {}]
  %s3 = inlined_call_operand.vmem [shape: f32[64,32], index: 3, kind: input, shape index: {}]
  %s4 = inlined_call_operand.vmem [shape: f32[1,32], index: 4, kind: input, shape index: {}]
  %s5 = inlined_call_operand.vmem [shape: f32[32,64], index: 5, kind: input, shape index: {}]
  %s6 = inlined_call_operand.vmem [shape: f32[1,64], index: 6, kind: input, shape index: {}]
  %s7 = inlined_call_operand.vmem [shape: f32[64,768], index: 7, kind: input, shape index: {}]
  %s8 = inlined_call_operand.vmem [shape: f32[1,768], index: 8, kind: input, shape index: {}]
  %s9 = inlined_call_operand.vmem [shape: f32[2,1,768], index: 9, kind: output, shape index: {}]
  %s10 = sld [smem:[#allocation0]]
  $region69: #{autoencoder_forward.1} parent=0
    _
  %s12 = ssub.s32 1, %s10
  %s13 = scalar_select 0, %s12, %s10
  loop: start=0, step=1, limit=4
  $region2: #{autoencoder_forward.1} parent=0 // loop_pre_header
    _
  $region3: #{autoencoder_forward.1} parent=0 // loop_header
    %s15 = sphi 0, %s19
    %p16 = scmp.ge.s32.totalorder %s15, 4
    %s25 = sphi 0, %s27
    %s28 = sphi 0, %s25
    %s29 = sphi 0, %s28
    %s45 = sphi 0, %s29
    %s49 = sphi 0, %s49
    %s51 = sphi 0, %s49
    %s52 = sphi 0, %s51
    %s66 = sphi 0, %s52
    %s70 = sphi 0, %s70
    %s72 = sphi 0, %s70
    %s73 = sphi 0, %s72
    %s87 = sphi 0, %s73
    %s91 = sphi 0, %s91
    %s93 = sphi 0, %s91
    %s94 = sphi 0, %s93
    %s108 = sphi 0, %s94
    %s112 = sphi 0, %s112
    %s114 = sphi 0, %s112
    %s115 = sphi 0, %s114
    %s129 = sphi 0, %s115
    %s133 = sphi 0, %s133
    %s135 = sphi 0, %s133
    %s136 = sphi 0, %s135
    %s150 = sphi 0, %s136
    %s154 = sphi 0, %s154
    %s156 = sphi 0, %s154
    %s157 = sphi 0, %s156
    %s171 = sphi 0, %s157
    %s175 = sphi 0, %s175
    %s177 = sphi 0, %s175
    %s178 = sphi 0, %s177
    %s192 = sphi 0, %s178
    %s196 = sphi 0, %s196
    %s198 = sphi 0, %s196
    %s199 = sphi 0, %s198
    %s213 = sphi 0, %s199
    %s219 = sphi 0, %s221
    %s222 = sphi 0, %s219
    %s223 = sphi 0, %s222
    %s239 = sphi 0, %s223
  $region4: #{autoencoder_forward.1} parent=0 // loop_header_branch
    %18 = sbr.rel (%p16) target = $region8
  $region5: #{autoencoder_forward.1} parent=0 // loop_body
    %s20 = ssub.s32 %s15, 1
    %s21 = ssub.s32 %s15, 2
    %s22 = sadd.s32 %s15, 1
    %s23 = ssub.s32 %s15, %s22
    %p24 = scmp.eq.s32.totalorder %s23, 0
    %s26 = sadd.s32 %s25, 1
    %s27 = scalar_select %p24, %s25, %s26
    %p30 = pneg %p24
    %p31 = scmp.eq.s32.totalorder %s15, 1
    %p32 = por %p30, %p31
    %p33 = scmp.ne.s32.totalorder %s25, %s28
    %p34 = scmp.eq.s32.totalorder %s15, 0
    %p35 = por %p33, %p34
    %p36 = scmp.ne.s32.totalorder %s25, %s28
    %p37 = scmp.eq.s32.totalorder %s20, 1
    %p38 = por %p36, %p37
    %p39 = scmp.ne.s32.totalorder %s28, %s29
    %p40 = scmp.eq.s32.totalorder %s20, 0
    %p41 = por %p39, %p40
    %p42 = scmp.ne.s32.totalorder %s28, %s29
    %p43 = scmp.eq.s32.totalorder %s21, 1
    %p44 = por %p42, %p43
    %p46 = scmp.ne.s32.totalorder %s29, %s45
    %p47 = scmp.eq.s32.totalorder %s21, 0
    %p48 = por %p46, %p47
    %s50 = sadd.s32 %s49, 1
    %p53 = scmp.eq.s32.totalorder %s15, 1
    %p54 = scmp.ne.s32.totalorder %s49, %s51
    %p55 = scmp.eq.s32.totalorder %s15, 0
    %p56 = por %p54, %p55
    %p57 = scmp.ne.s32.totalorder %s49, %s51
    %p58 = scmp.eq.s32.totalorder %s20, 1
    %p59 = por %p57, %p58
    %p60 = scmp.ne.s32.totalorder %s51, %s52
    %p61 = scmp.eq.s32.totalorder %s20, 0
    %p62 = por %p60, %p61
    %p63 = scmp.ne.s32.totalorder %s51, %s52
    %p64 = scmp.eq.s32.totalorder %s21, 1
    %p65 = por %p63, %p64
    %p67 = scmp.ne.s32.totalorder %s52, %s66
    %p68 = scmp.eq.s32.totalorder %s21, 0
    %p69 = por %p67, %p68
    %s71 = sadd.s32 %s70, 1
    %p74 = scmp.eq.s32.totalorder %s15, 1
    %p75 = scmp.ne.s32.totalorder %s70, %s72
    %p76 = scmp.eq.s32.totalorder %s15, 0
    %p77 = por %p75, %p76
    %p78 = scmp.ne.s32.totalorder %s70, %s72
    %p79 = scmp.eq.s32.totalorder %s20, 1
    %p80 = por %p78, %p79
    %p81 = scmp.ne.s32.totalorder %s72, %s73
    %p82 = scmp.eq.s32.totalorder %s20, 0
    %p83 = por %p81, %p82
    %p84 = scmp.ne.s32.totalorder %s72, %s73
    %p85 = scmp.eq.s32.totalorder %s21, 1
    %p86 = por %p84, %p85
    %p88 = scmp.ne.s32.totalorder %s73, %s87
    %p89 = scmp.eq.s32.totalorder %s21, 0
    %p90 = por %p88, %p89
    %s92 = sadd.s32 %s91, 1
    %p95 = scmp.eq.s32.totalorder %s15, 1
    %p96 = scmp.ne.s32.totalorder %s91, %s93
    %p97 = scmp.eq.s32.totalorder %s15, 0
    %p98 = por %p96, %p97
    %p99 = scmp.ne.s32.totalorder %s91, %s93
    %p100 = scmp.eq.s32.totalorder %s20, 1
    %p101 = por %p99, %p100
    %p102 = scmp.ne.s32.totalorder %s93, %s94
    %p103 = scmp.eq.s32.totalorder %s20, 0
    %p104 = por %p102, %p103
    %p105 = scmp.ne.s32.totalorder %s93, %s94
    %p106 = scmp.eq.s32.totalorder %s21, 1
    %p107 = por %p105, %p106
    %p109 = scmp.ne.s32.totalorder %s94, %s108
    %p110 = scmp.eq.s32.totalorder %s21, 0
    %p111 = por %p109, %p110
    %s113 = sadd.s32 %s112, 1
    %p116 = scmp.eq.s32.totalorder %s15, 1
    %p117 = scmp.ne.s32.totalorder %s112, %s114
    %p118 = scmp.eq.s32.totalorder %s15, 0
    %p119 = por %p117, %p118
    %p120 = scmp.ne.s32.totalorder %s112, %s114
    %p121 = scmp.eq.s32.totalorder %s20, 1
    %p122 = por %p120, %p121
    %p123 = scmp.ne.s32.totalorder %s114, %s115
    %p124 = scmp.eq.s32.totalorder %s20, 0
    %p125 = por %p123, %p124
    %p126 = scmp.ne.s32.totalorder %s114, %s115
    %p127 = scmp.eq.s32.totalorder %s21, 1
    %p128 = por %p126, %p127
    %p130 = scmp.ne.s32.totalorder %s115, %s129
    %p131 = scmp.eq.s32.totalorder %s21, 0
    %p132 = por %p130, %p131
    %s134 = sadd.s32 %s133, 1
    %p137 = scmp.eq.s32.totalorder %s15, 1
    %p138 = scmp.ne.s32.totalorder %s133, %s135
    %p139 = scmp.eq.s32.totalorder %s15, 0
    %p140 = por %p138, %p139
    %p141 = scmp.ne.s32.totalorder %s133, %s135
    %p142 = scmp.eq.s32.totalorder %s20, 1
    %p143 = por %p141, %p142
    %p144 = scmp.ne.s32.totalorder %s135, %s136
    %p145 = scmp.eq.s32.totalorder %s20, 0
    %p146 = por %p144, %p145
    %p147 = scmp.ne.s32.totalorder %s135, %s136
    %p148 = scmp.eq.s32.totalorder %s21, 1
    %p149 = por %p147, %p148
    %p151 = scmp.ne.s32.totalorder %s136, %s150
    %p152 = scmp.eq.s32.totalorder %s21, 0
    %p153 = por %p151, %p152
    %s155 = sadd.s32 %s154, 1
    %p158 = scmp.eq.s32.totalorder %s15, 1
    %p159 = scmp.ne.s32.totalorder %s154, %s156
    %p160 = scmp.eq.s32.totalorder %s15, 0
    %p161 = por %p159, %p160
    %p162 = scmp.ne.s32.totalorder %s154, %s156
    %p163 = scmp.eq.s32.totalorder %s20, 1
    %p164 = por %p162, %p163
    %p165 = scmp.ne.s32.totalorder %s156, %s157
    %p166 = scmp.eq.s32.totalorder %s20, 0
    %p167 = por %p165, %p166
    %p168 = scmp.ne.s32.totalorder %s156, %s157
    %p169 = scmp.eq.s32.totalorder %s21, 1
    %p170 = por %p168, %p169
    %p172 = scmp.ne.s32.totalorder %s157, %s171
    %p173 = scmp.eq.s32.totalorder %s21, 0
    %p174 = por %p172, %p173
    %s176 = sadd.s32 %s175, 1
    %p179 = scmp.eq.s32.totalorder %s15, 1
    %p180 = scmp.ne.s32.totalorder %s175, %s177
    %p181 = scmp.eq.s32.totalorder %s15, 0
    %p182 = por %p180, %p181
    %p183 = scmp.ne.s32.totalorder %s175, %s177
    %p184 = scmp.eq.s32.totalorder %s20, 1
    %p185 = por %p183, %p184
    %p186 = scmp.ne.s32.totalorder %s177, %s178
    %p187 = scmp.eq.s32.totalorder %s20, 0
    %p188 = por %p186, %p187
    %p189 = scmp.ne.s32.totalorder %s177, %s178
    %p190 = scmp.eq.s32.totalorder %s21, 1
    %p191 = por %p189, %p190
    %p193 = scmp.ne.s32.totalorder %s178, %s192
    %p194 = scmp.eq.s32.totalorder %s21, 0
    %p195 = por %p193, %p194
    %s197 = sadd.s32 %s196, 1
    %p200 = scmp.eq.s32.totalorder %s15, 1
    %p201 = scmp.ne.s32.totalorder %s196, %s198
    %p202 = scmp.eq.s32.totalorder %s15, 0
    %p203 = por %p201, %p202
    %p204 = scmp.ne.s32.totalorder %s196, %s198
    %p205 = scmp.eq.s32.totalorder %s20, 1
    %p206 = por %p204, %p205
    %p207 = scmp.ne.s32.totalorder %s198, %s199
    %p208 = scmp.eq.s32.totalorder %s20, 0
    %p209 = por %p207, %p208
    %p210 = scmp.ne.s32.totalorder %s198, %s199
    %p211 = scmp.eq.s32.totalorder %s21, 1
    %p212 = por %p210, %p211
    %p214 = scmp.ne.s32.totalorder %s199, %s213
    %p215 = scmp.eq.s32.totalorder %s21, 0
    %p216 = por %p214, %p215
    %s217 = ssub.s32 %s15, %s22
    %p218 = scmp.eq.s32.totalorder %s217, 0
    %s220 = sadd.s32 %s219, 1
    %s221 = scalar_select %p218, %s219, %s220
    %p224 = pneg %p218
    %p225 = scmp.eq.s32.totalorder %s15, 1
    %p226 = por %p224, %p225
    %p227 = scmp.ne.s32.totalorder %s219, %s222
    %p228 = scmp.eq.s32.totalorder %s15, 0
    %p229 = por %p227, %p228
    %p230 = scmp.ne.s32.totalorder %s219, %s222
    %p231 = scmp.eq.s32.totalorder %s20, 1
    %p232 = por %p230, %p231
    %p233 = scmp.ne.s32.totalorder %s222, %s223
    %p234 = scmp.eq.s32.totalorder %s20, 0
    %p235 = por %p233, %p234
    %p236 = scmp.ne.s32.totalorder %s222, %s223
    %p237 = scmp.eq.s32.totalorder %s21, 1
    %p238 = por %p236, %p237
    %p240 = scmp.ne.s32.totalorder %s223, %s239
    %p241 = scmp.eq.s32.totalorder %s21, 0
    %p242 = por %p240, %p241
    %p243 = scmp.le.s32.totalorder 1, %s15
    %p244 = scmp.lt.s32.totalorder %s15, 3
    %p245 = pnand %p243, %p244
    %p246 = pneg %p245
    // Predicated region
    $region9: #{autoencoder_forward.1} parent=5 // pred_check
      _
    $region10: #{autoencoder_forward.1} parent=5 // pred_check_branch
      %248 = sbr.rel (%p245) target = $region12
    $region11: #{autoencoder_forward.1} parent=5 // pred_region
      %s249 = ssub.s32 %s15, 1
      // Predicated region
      $region13: #{autoencoder_forward.1} parent=11 // pred_check
        %p250 = pneg %p62
      $region14: #{autoencoder_forward.1} parent=11 // pred_check_branch
        %252 = sbr.rel (%p250) target = $region16
      $region15: #{autoencoder_forward.1} parent=11 // pred_region
        _
      $region16: #{autoencoder_forward.1} parent=11 // pred_fallthru
        _
      // Predicated region
      $region17: #{autoencoder_forward.1} parent=11 // pred_check
        %p253 = pneg %p83
      $region18: #{autoencoder_forward.1} parent=11 // pred_check_branch
        %255 = sbr.rel (%p253) target = $region20
      $region19: #{autoencoder_forward.1} parent=11 // pred_region
        _
      $region20: #{autoencoder_forward.1} parent=11 // pred_fallthru
        _
      // Predicated region
      $region21: #{autoencoder_forward.1} parent=11 // pred_check
        %p256 = pneg %p104
      $region22: #{autoencoder_forward.1} parent=11 // pred_check_branch
        %258 = sbr.rel (%p256) target = $region24
      $region23: #{autoencoder_forward.1} parent=11 // pred_region
        _
      $region24: #{autoencoder_forward.1} parent=11 // pred_fallthru
        _
      // Predicated region
      $region25: #{autoencoder_forward.1} parent=11 // pred_check
        %p259 = pneg %p125
      $region26: #{autoencoder_forward.1} parent=11 // pred_check_branch
        %261 = sbr.rel (%p259) target = $region28
      $region27: #{autoencoder_forward.1} parent=11 // pred_region
        _
      $region28: #{autoencoder_forward.1} parent=11 // pred_fallthru
        _
      // Predicated region
      $region29: #{autoencoder_forward.1} parent=11 // pred_check
        %p262 = pneg %p146
      $region30: #{autoencoder_forward.1} parent=11 // pred_check_branch
        %264 = sbr.rel (%p262) target = $region32
      $region31: #{autoencoder_forward.1} parent=11 // pred_region
        _
      $region32: #{autoencoder_forward.1} parent=11 // pred_fallthru
        _
      // Predicated region
      $region33: #{autoencoder_forward.1} parent=11 // pred_check
        %p265 = pneg %p167
      $region34: #{autoencoder_forward.1} parent=11 // pred_check_branch
        %267 = sbr.rel (%p265) target = $region36
      $region35: #{autoencoder_forward.1} parent=11 // pred_region
        _
      $region36: #{autoencoder_forward.1} parent=11 // pred_fallthru
        _
      // Predicated region
      $region37: #{autoencoder_forward.1} parent=11 // pred_check
        %p268 = pneg %p188
      $region38: #{autoencoder_forward.1} parent=11 // pred_check_branch
        %270 = sbr.rel (%p268) target = $region40
      $region39: #{autoencoder_forward.1} parent=11 // pred_region
        _
      $region40: #{autoencoder_forward.1} parent=11 // pred_fallthru
        _
      // Predicated region
      $region41: #{autoencoder_forward.1} parent=11 // pred_check
        %p271 = pneg %p209
      $region42: #{autoencoder_forward.1} parent=11 // pred_check_branch
        %273 = sbr.rel (%p271) target = $region44
      $region43: #{autoencoder_forward.1} parent=11 // pred_region
        _
      $region44: #{autoencoder_forward.1} parent=11 // pred_fallthru
        _
    $region12: #{autoencoder_forward.1} parent=5 // pred_fallthru
      _
    %p274 = scmp.lt.s32.totalorder %s15, 2
    // Predicated region
    $region45: #{autoencoder_forward.1} parent=5 // pred_check
      %p275 = pneg %p274
    $region46: #{autoencoder_forward.1} parent=5 // pred_check_branch
      %277 = sbr.rel (%p275) target = $region48
    $region47: #{autoencoder_forward.1} parent=5 // pred_region
      // Predicated region
      $region49: #{autoencoder_forward.1} parent=47 // pred_check
        %p278 = pneg %p35
      $region50: #{autoencoder_forward.1} parent=47 // pred_check_branch
        %280 = sbr.rel (%p278) target = $region52
      $region51: #{autoencoder_forward.1} parent=47 // pred_region
        %p281 = scmp.lt.s32.totalorder %s15, 1
        %s282 = scalar_select %p281, %s15, 1
        %s283 = smul.addr %s282, 6
        %s284 = scalar_lea.vmem %s0, %s283
      $region52: #{autoencoder_forward.1} parent=47 // pred_fallthru
        _
    $region48: #{autoencoder_forward.1} parent=5 // pred_fallthru
      _
    %p285 = scmp.le.s32.totalorder 1, %s15
    %p286 = scmp.lt.s32.totalorder %s15, 3
    %p287 = pnand %p285, %p286
    %p288 = pneg %p287
    // Predicated region
    $region53: #{autoencoder_forward.1} parent=5 // pred_check
      _
    $region54: #{autoencoder_forward.1} parent=5 // pred_check_branch
      %290 = sbr.rel (%p287) target = $region56
    $region55: #{autoencoder_forward.1} parent=5 // pred_region
      %s291 = ssub.s32 %s15, 1
      %p292 = scmp.lt.s32.totalorder %s20, 1
      %s293 = scalar_select %p292, %s20, 1
      %s294 = smul.addr %s293, 6
      %s295 = scalar_lea.vmem %s0, %s294
      %p296 = pneg %p41
      %p297 = pneg %p38
      %p298 = pneg %p62
      %p299 = pneg %p59
      %p300 = pneg %p83
      %p301 = pneg %p80
      %p302 = pneg %p104
      %p303 = pneg %p101
      %p304 = pneg %p125
      %p305 = pneg %p122
      %p306 = pneg %p146
      %p307 = pneg %p143
      %p308 = pneg %p167
      %p309 = pneg %p164
      %p310 = pneg %p188
      %p311 = pneg %p185
      %p312 = pneg %p209
      %p313 = pneg %p206
      %p314 = pneg %p235
      %p315 = pneg %p232
      %p316 = scmp.lt.s32.totalorder %s20, 1
      %s317 = scalar_select %p316, %s20, 1
      %s318 = smul.addr %s317, 6
      %s319 = scalar_lea.vmem %s9, %s318
      %p320 = scmp.lt.s32.totalorder %s20, 1
      %s321 = scalar_select %p320, %s20, 1
      %s322 = smul.addr %s321, 6
      %s323 = scalar_lea.vmem %s0, %s322
      %p324 = scmp.lt.s32.totalorder %s20, 1
      %s325 = scalar_select %p324, %s20, 1
      %s326 = smul.addr %s325, 6
      %s327 = scalar_lea.vmem %s9, %s326
      %v328 = vld [vmem:[%s323] sm:$0x3f]
      %v329 = vld [vmem:[%s1] sm:$0xff]
      %v330 = vld [vmem:[%s1 + $0x8] sm:$0xff]
      %v331 = vld [vmem:[%s1 + $0x10] sm:$0xff]
      %v332 = vld [vmem:[%s1 + $0x18] sm:$0xff]
      %v333 = vld [vmem:[%s1 + $0x20] sm:$0xff]
      %v334 = vld [vmem:[%s1 + $0x28] sm:$0xff]
      %v335 = vld [vmem:[%s1 + $0x30] sm:$0xff]
      %v336 = vld [vmem:[%s1 + $0x38] sm:$0xff]
      %v337 = vld [vmem:[%s1 + $0x40] sm:$0xff]
      %v338 = vld [vmem:[%s1 + $0x48] sm:$0xff]
      %v339 = vld [vmem:[%s1 + $0x50] sm:$0xff]
      %v340 = vld [vmem:[%s1 + $0x58] sm:$0xff]
      %v341 = vld [vmem:[%s1 + $0x60] sm:$0xff]
      %v342 = vld [vmem:[%s1 + $0x68] sm:$0xff]
      %v343 = vld [vmem:[%s1 + $0x70] sm:$0xff]
      %v344 = vld [vmem:[%s1 + $0x78] sm:$0xff]
      %v345 = vld [vmem:[%s1 + $0x80] sm:$0xff]
      %v346 = vld [vmem:[%s1 + $0x88] sm:$0xff]
      %v347 = vld [vmem:[%s1 + $0x90] sm:$0xff]
      %v348 = vld [vmem:[%s1 + $0x98] sm:$0xff]
      %v349 = vld [vmem:[%s1 + $0xa0] sm:$0xff]
      %v350 = vld [vmem:[%s1 + $0xa8] sm:$0xff]
      %v351 = vld [vmem:[%s1 + $0xb0] sm:$0xff]
      %v352 = vld [vmem:[%s1 + $0xb8] sm:$0xff]
      %v353 = vld [vmem:[%s1 + $0xc0] sm:$0xff]
      %v354 = vld [vmem:[%s1 + $0xc8] sm:$0xff]
      %v355 = vld [vmem:[%s1 + $0xd0] sm:$0xff]
      %v356 = vld [vmem:[%s1 + $0xd8] sm:$0xff]
      %v357 = vld [vmem:[%s1 + $0xe0] sm:$0xff]
      %v358 = vld [vmem:[%s1 + $0xe8] sm:$0xff]
      %v359 = vld [vmem:[%s1 + $0xf0] sm:$0xff]
      %v360 = vld [vmem:[%s1 + $0xf8] sm:$0xff]
      %v361 = vld [vmem:[%s1 + $0x100] sm:$0xff]
      %v362 = vld [vmem:[%s1 + $0x108] sm:$0xff]
      %v363 = vld [vmem:[%s1 + $0x110] sm:$0xff]
      %v364 = vld [vmem:[%s1 + $0x118] sm:$0xff]
      %v365 = vld [vmem:[%s1 + $0x120] sm:$0xff]
      %v366 = vld [vmem:[%s1 + $0x128] sm:$0xff]
      %v367 = vld [vmem:[%s1 + $0x130] sm:$0xff]
      %v368 = vld [vmem:[%s1 + $0x138] sm:$0xff]
      %v369 = vld [vmem:[%s1 + $0x140] sm:$0xff]
      %v370 = vld [vmem:[%s1 + $0x148] sm:$0xff]
      %v371 = vld [vmem:[%s1 + $0x150] sm:$0xff]
      %v372 = vld [vmem:[%s1 + $0x158] sm:$0xff]
      %v373 = vld [vmem:[%s1 + $0x160] sm:$0xff]
      %v374 = vld [vmem:[%s1 + $0x168] sm:$0xff]
      %v375 = vld [vmem:[%s1 + $0x170] sm:$0xff]
      %v376 = vld [vmem:[%s1 + $0x178] sm:$0xff]
      %v377 = vld [vmem:[%s1 + $0x180] sm:$0xff]
      %v378 = vld [vmem:[%s1 + $0x188] sm:$0xff]
      %v379 = vld [vmem:[%s1 + $0x190] sm:$0xff]
      %v380 = vld [vmem:[%s1 + $0x198] sm:$0xff]
      %v381 = vld [vmem:[%s1 + $0x1a0] sm:$0xff]
      %v382 = vld [vmem:[%s1 + $0x1a8] sm:$0xff]
      %v383 = vld [vmem:[%s1 + $0x1b0] sm:$0xff]
      %v384 = vld [vmem:[%s1 + $0x1b8] sm:$0xff]
      %v385 = vld [vmem:[%s1 + $0x1c0] sm:$0xff]
      %v386 = vld [vmem:[%s1 + $0x1c8] sm:$0xff]
      %v387 = vld [vmem:[%s1 + $0x1d0] sm:$0xff]
      %v388 = vld [vmem:[%s1 + $0x1d8] sm:$0xff]
      %v389 = vld [vmem:[%s1 + $0x1e0] sm:$0xff]
      %v390 = vld [vmem:[%s1 + $0x1e8] sm:$0xff]
      %v391 = vld [vmem:[%s1 + $0x1f0] sm:$0xff]
      %v392 = vld [vmem:[%s1 + $0x1f8] sm:$0xff]
      %v393 = vld [vmem:[%s1 + $0x200] sm:$0xff]
      %v394 = vld [vmem:[%s1 + $0x208] sm:$0xff]
      %v395 = vld [vmem:[%s1 + $0x210] sm:$0xff]
      %v396 = vld [vmem:[%s1 + $0x218] sm:$0xff]
      %v397 = vld [vmem:[%s1 + $0x220] sm:$0xff]
      %v398 = vld [vmem:[%s1 + $0x228] sm:$0xff]
      %v399 = vld [vmem:[%s1 + $0x230] sm:$0xff]
      %v400 = vld [vmem:[%s1 + $0x238] sm:$0xff]
      %v401 = vld [vmem:[%s1 + $0x240] sm:$0xff]
      %v402 = vld [vmem:[%s1 + $0x248] sm:$0xff]
      %v403 = vld [vmem:[%s1 + $0x250] sm:$0xff]
      %v404 = vld [vmem:[%s1 + $0x258] sm:$0xff]
      %v405 = vld [vmem:[%s1 + $0x260] sm:$0xff]
      %v406 = vld [vmem:[%s1 + $0x268] sm:$0xff]
      %v407 = vld [vmem:[%s1 + $0x270] sm:$0xff]
      %v408 = vld [vmem:[%s1 + $0x278] sm:$0xff]
      %v409 = vld [vmem:[%s1 + $0x280] sm:$0xff]
      %v410 = vld [vmem:[%s1 + $0x288] sm:$0xff]
      %v411 = vld [vmem:[%s1 + $0x290] sm:$0xff]
      %v412 = vld [vmem:[%s1 + $0x298] sm:$0xff]
      %v413 = vld [vmem:[%s1 + $0x2a0] sm:$0xff]
      %v414 = vld [vmem:[%s1 + $0x2a8] sm:$0xff]
      %v415 = vld [vmem:[%s1 + $0x2b0] sm:$0xff]
      %v416 = vld [vmem:[%s1 + $0x2b8] sm:$0xff]
      %v417 = vld [vmem:[%s1 + $0x2c0] sm:$0xff]
      %v418 = vld [vmem:[%s1 + $0x2c8] sm:$0xff]
      %v419 = vld [vmem:[%s1 + $0x2d0] sm:$0xff]
      %v420 = vld [vmem:[%s1 + $0x2d8] sm:$0xff]
      %v421 = vld [vmem:[%s1 + $0x2e0] sm:$0xff]
      %v422 = vld [vmem:[%s1 + $0x2e8] sm:$0xff]
      %v423 = vld [vmem:[%s1 + $0x2f0] sm:$0xff]
      %v424 = vld [vmem:[%s1 + $0x2f8] sm:$0xff]
      %v425 = vld [vmem:[%s2] sm:$0x1]
      %v427 = vlaneseq
      %v428 = vshrl.u32 %v427, 7
      %v429 = vsub.s32 0, %v428
      %v430 = vrot.slane %v328, %v429
      %v431 = vlaneseq
      %v432 = vshrl.u32 %v431, 7
      %v433 = vsub.s32 1, %v432
      %v434 = vrot.slane %v328, %v433
      %v435 = vlaneseq
      %v436 = vshrl.u32 %v435, 7
      %v437 = vsub.s32 2, %v436
      %v438 = vrot.slane %v328, %v437
      %v439 = vlaneseq
      %v440 = vshrl.u32 %v439, 7
      %v441 = vsub.s32 3, %v440
      %v442 = vrot.slane %v328, %v441
      %v443 = vlaneseq
      %v444 = vshrl.u32 %v443, 7
      %v445 = vsub.s32 4, %v444
      %v446 = vrot.slane %v328, %v445
      %v447 = vlaneseq
      %v448 = vshrl.u32 %v447, 7
      %v449 = vsub.s32 5, %v448
      %v450 = vrot.slane %v328, %v449
      %457 = vmatprep.subr.mxu0 0.0
      %458 = vmatpush1.msra.mxu0 %v329
      %459 = vmatprep.subr.mxu0 0.0
      %460 = vmatpush1.msra.mxu0 %v330
      %461 = vmatprep.subr.mxu0 0.0
      %462 = vmatpush1.msra.mxu0 %v331
      %463 = vmatprep.subr.mxu0 0.0
      %464 = vmatpush1.msra.mxu0 %v332
      %465 = vmatprep.subr.mxu0 0.0
      %466 = vmatpush1.msra.mxu0 %v333
      %467 = vmatprep.subr.mxu0 0.0
      %468 = vmatpush1.msra.mxu0 %v334
      %469 = vmatprep.subr.mxu0 0.0
      %470 = vmatpush1.msra.mxu0 %v335
      %471 = vmatprep.subr.mxu0 0.0
      %472 = vmatpush1.msra.mxu0 %v336
      %473 = vmatprep.subr.mxu0 0.0
      %474 = vmatpush1.msra.mxu0 %v337
      %475 = vmatprep.subr.mxu0 0.0
      %476 = vmatpush1.msra.mxu0 %v338
      %477 = vmatprep.subr.mxu0 0.0
      %478 = vmatpush1.msra.mxu0 %v339
      %479 = vmatprep.subr.mxu0 0.0
      %480 = vmatpush1.msra.mxu0 %v340
      %481 = vmatprep.subr.mxu0 0.0
      %482 = vmatpush1.msra.mxu0 %v341
      %483 = vmatprep.subr.mxu0 0.0
      %484 = vmatpush1.msra.mxu0 %v342
      %485 = vmatprep.subr.mxu0 0.0
      %486 = vmatpush1.msra.mxu0 %v343
      %487 = vmatprep.subr.mxu0 0.0
      %488 = vmatpush1.msra.mxu0 %v344
      %489 = vmatprep.subr.mxu0 0.0
      %490 = vmatpush1.msra.mxu0 %v345
      %491 = vmatprep.subr.mxu0 0.0
      %492 = vmatpush1.msra.mxu0 %v346
      %493 = vmatprep.subr.mxu0 0.0
      %494 = vmatpush1.msra.mxu0 %v347
      %495 = vmatprep.subr.mxu0 0.0
      %496 = vmatpush1.msra.mxu0 %v348
      %497 = vmatprep.subr.mxu0 0.0
      %498 = vmatpush1.msra.mxu0 %v349
      %499 = vmatprep.subr.mxu0 0.0
      %500 = vmatpush1.msra.mxu0 %v350
      %501 = vmatprep.subr.mxu0 0.0
      %502 = vmatpush1.msra.mxu0 %v351
      %503 = vmatprep.subr.mxu0 0.0
      %504 = vmatpush1.msra.mxu0 %v352
      %505 = vmatprep.subr.mxu0 0.0
      %506 = vmatpush1.msra.mxu0 %v353
      %507 = vmatprep.subr.mxu0 0.0
      %508 = vmatpush1.msra.mxu0 %v354
      %509 = vmatprep.subr.mxu0 0.0
      %510 = vmatpush1.msra.mxu0 %v355
      %511 = vmatprep.subr.mxu0 0.0
      %512 = vmatpush1.msra.mxu0 %v356
      %513 = vmatprep.subr.mxu0 0.0
      %514 = vmatpush1.msra.mxu0 %v357
      %515 = vmatprep.subr.mxu0 0.0
      %516 = vmatpush1.msra.mxu0 %v358
      %517 = vmatprep.subr.mxu0 0.0
      %518 = vmatpush1.msra.mxu0 %v359
      %519 = vmatprep.subr.mxu0 0.0
      %520 = vmatpush1.msra.mxu0 %v360
      %521 = vmatprep.mubr.f32.mxu0 %v434
      %522 = vmatmul.mubr.f32.gmra.mrb[0].mxu0 %v430
      %v523 = vpop.f32.mrb[0].mxu0
      %v524 = vadd.f32 %v425, %v523
      %v525 = vpop.f32.mrb[0].mxu0
      %526 = vdwg.mxu0
      %527 = vmatprep.subr.mxu0 0.0
      %528 = vmatpush1.msra.mxu0 %v361
      %529 = vmatprep.subr.mxu0 0.0
      %530 = vmatpush1.msra.mxu0 %v362
      %531 = vmatprep.subr.mxu0 0.0
      %532 = vmatpush1.msra.mxu0 %v363
      %533 = vmatprep.subr.mxu0 0.0
      %534 = vmatpush1.msra.mxu0 %v364
      %535 = vmatprep.subr.mxu0 0.0
      %536 = vmatpush1.msra.mxu0 %v365
      %537 = vmatprep.subr.mxu0 0.0
      %538 = vmatpush1.msra.mxu0 %v366
      %539 = vmatprep.subr.mxu0 0.0
      %540 = vmatpush1.msra.mxu0 %v367
      %541 = vmatprep.subr.mxu0 0.0
      %542 = vmatpush1.msra.mxu0 %v368
      %543 = vmatprep.subr.mxu0 0.0
      %544 = vmatpush1.msra.mxu0 %v369
      %545 = vmatprep.subr.mxu0 0.0
      %546 = vmatpush1.msra.mxu0 %v370
      %547 = vmatprep.subr.mxu0 0.0
      %548 = vmatpush1.msra.mxu0 %v371
      %549 = vmatprep.subr.mxu0 0.0
      %550 = vmatpush1.msra.mxu0 %v372
      %551 = vmatprep.subr.mxu0 0.0
      %552 = vmatpush1.msra.mxu0 %v373
      %553 = vmatprep.subr.mxu0 0.0
      %554 = vmatpush1.msra.mxu0 %v374
      %555 = vmatprep.subr.mxu0 0.0
      %556 = vmatpush1.msra.mxu0 %v375
      %557 = vmatprep.subr.mxu0 0.0
      %558 = vmatpush1.msra.mxu0 %v376
      %559 = vmatprep.subr.mxu0 0.0
      %560 = vmatpush1.msra.mxu0 %v377
      %561 = vmatprep.subr.mxu0 0.0
      %562 = vmatpush1.msra.mxu0 %v378
      %563 = vmatprep.subr.mxu0 0.0
      %564 = vmatpush1.msra.mxu0 %v379
      %565 = vmatprep.subr.mxu0 0.0
      %566 = vmatpush1.msra.mxu0 %v380
      %567 = vmatprep.subr.mxu0 0.0
      %568 = vmatpush1.msra.mxu0 %v381
      %569 = vmatprep.subr.mxu0 0.0
      %570 = vmatpush1.msra.mxu0 %v382
      %571 = vmatprep.subr.mxu0 0.0
      %572 = vmatpush1.msra.mxu0 %v383
      %573 = vmatprep.subr.mxu0 0.0
      %574 = vmatpush1.msra.mxu0 %v384
      %575 = vmatprep.subr.mxu0 0.0
      %576 = vmatpush1.msra.mxu0 %v385
      %577 = vmatprep.subr.mxu0 0.0
      %578 = vmatpush1.msra.mxu0 %v386
      %579 = vmatprep.subr.mxu0 0.0
      %580 = vmatpush1.msra.mxu0 %v387
      %581 = vmatprep.subr.mxu0 0.0
      %582 = vmatpush1.msra.mxu0 %v388
      %583 = vmatprep.subr.mxu0 0.0
      %584 = vmatpush1.msra.mxu0 %v389
      %585 = vmatprep.subr.mxu0 0.0
      %586 = vmatpush1.msra.mxu0 %v390
      %587 = vmatprep.subr.mxu0 0.0
      %588 = vmatpush1.msra.mxu0 %v391
      %589 = vmatprep.subr.mxu0 0.0
      %590 = vmatpush1.msra.mxu0 %v392
      %591 = vmatprep.mubr.f32.mxu0 %v442
      %592 = vmatmul.mubr.f32.gmra.mrb[0].mxu0 %v438
      %v593 = vpop.f32.mrb[0].mxu0
      %v594 = vadd.f32 %v524, %v593
      %v595 = vpop.f32.mrb[0].mxu0
      %596 = vdwg.mxu0
      %597 = vmatprep.subr.mxu0 0.0
      %598 = vmatpush1.msra.mxu0 %v393
      %599 = vmatprep.subr.mxu0 0.0
      %600 = vmatpush1.msra.mxu0 %v394
      %601 = vmatprep.subr.mxu0 0.0
      %602 = vmatpush1.msra.mxu0 %v395
      %603 = vmatprep.subr.mxu0 0.0
      %604 = vmatpush1.msra.mxu0 %v396
      %605 = vmatprep.subr.mxu0 0.0
      %606 = vmatpush1.msra.mxu0 %v397
      %607 = vmatprep.subr.mxu0 0.0
      %608 = vmatpush1.msra.mxu0 %v398
      %609 = vmatprep.subr.mxu0 0.0
      %610 = vmatpush1.msra.mxu0 %v399
      %611 = vmatprep.subr.mxu0 0.0
      %612 = vmatpush1.msra.mxu0 %v400
      %613 = vmatprep.subr.mxu0 0.0
      %614 = vmatpush1.msra.mxu0 %v401
      %615 = vmatprep.subr.mxu0 0.0
      %616 = vmatpush1.msra.mxu0 %v402
      %617 = vmatprep.subr.mxu0 0.0
      %618 = vmatpush1.msra.mxu0 %v403
      %619 = vmatprep.subr.mxu0 0.0
      %620 = vmatpush1.msra.mxu0 %v404
      %621 = vmatprep.subr.mxu0 0.0
      %622 = vmatpush1.msra.mxu0 %v405
      %623 = vmatprep.subr.mxu0 0.0
      %624 = vmatpush1.msra.mxu0 %v406
      %625 = vmatprep.subr.mxu0 0.0
      %626 = vmatpush1.msra.mxu0 %v407
      %627 = vmatprep.subr.mxu0 0.0
      %628 = vmatpush1.msra.mxu0 %v408
      %629 = vmatprep.subr.mxu0 0.0
      %630 = vmatpush1.msra.mxu0 %v409
      %631 = vmatprep.subr.mxu0 0.0
      %632 = vmatpush1.msra.mxu0 %v410
      %633 = vmatprep.subr.mxu0 0.0
      %634 = vmatpush1.msra.mxu0 %v411
      %635 = vmatprep.subr.mxu0 0.0
      %636 = vmatpush1.msra.mxu0 %v412
      %637 = vmatprep.subr.mxu0 0.0
      %638 = vmatpush1.msra.mxu0 %v413
      %639 = vmatprep.subr.mxu0 0.0
      %640 = vmatpush1.msra.mxu0 %v414
      %641 = vmatprep.subr.mxu0 0.0
      %642 = vmatpush1.msra.mxu0 %v415
      %643 = vmatprep.subr.mxu0 0.0
      %644 = vmatpush1.msra.mxu0 %v416
      %645 = vmatprep.subr.mxu0 0.0
      %646 = vmatpush1.msra.mxu0 %v417
      %647 = vmatprep.subr.mxu0 0.0
      %648 = vmatpush1.msra.mxu0 %v418
      %649 = vmatprep.subr.mxu0 0.0
      %650 = vmatpush1.msra.mxu0 %v419
      %651 = vmatprep.subr.mxu0 0.0
      %652 = vmatpush1.msra.mxu0 %v420
      %653 = vmatprep.subr.mxu0 0.0
      %654 = vmatpush1.msra.mxu0 %v421
      %655 = vmatprep.subr.mxu0 0.0
      %656 = vmatpush1.msra.mxu0 %v422
      %657 = vmatprep.subr.mxu0 0.0
      %658 = vmatpush1.msra.mxu0 %v423
      %659 = vmatprep.subr.mxu0 0.0
      %660 = vmatpush1.msra.mxu0 %v424
      %661 = vmatprep.mubr.f32.mxu0 %v450
      %662 = vmatmul.mubr.f32.gmra.mrb[0].mxu0 %v446
      %v663 = vpop.f32.mrb[0].mxu0
      %v664 = vadd.f32 %v594, %v663
      %v665 = vpop.f32.mrb[0].mxu0
      %666 = vdwg.mxu0
      %v667 = vmax.f32 %v664, 0.0
      %v668 = vld [vmem:[%s3] sm:$0xff]
      %v669 = vld [vmem:[%s3 + $0x8] sm:$0xff]
      %v670 = vld [vmem:[%s3 + $0x10] sm:$0xff]
      %v671 = vld [vmem:[%s3 + $0x18] sm:$0xff]
      %v672 = vld [vmem:[%s3 + $0x20] sm:$0xff]
      %v673 = vld [vmem:[%s3 + $0x28] sm:$0xff]
      %v674 = vld [vmem:[%s3 + $0x30] sm:$0xff]
      %v675 = vld [vmem:[%s3 + $0x38] sm:$0xff]
      %v676 = vld [vmem:[%s4] sm:$0x1]
      %vm677 = vcmask 523264
      %v679 = vsel %vm677, %v667, 0
      %681 = vmatprep.subr.mxu0 0.0
      %682 = vmatpush1.msra.mxu0 %v668
      %683 = vmatprep.subr.mxu0 0.0
      %684 = vmatpush1.msra.mxu0 %v669
      %685 = vmatprep.subr.mxu0 0.0
      %686 = vmatpush1.msra.mxu0 %v670
      %687 = vmatprep.subr.mxu0 0.0
      %688 = vmatpush1.msra.mxu0 %v671
      %689 = vmatprep.subr.mxu0 0.0
      %690 = vmatpush1.msra.mxu0 %v672
      %691 = vmatprep.subr.mxu0 0.0
      %692 = vmatpush1.msra.mxu0 %v673
      %693 = vmatprep.subr.mxu0 0.0
      %694 = vmatpush1.msra.mxu0 %v674
      %695 = vmatprep.subr.mxu0 0.0
      %696 = vmatpush1.msra.mxu0 %v675
      %697 = vmatprep.subr.mxu0 0.0
      %698 = vmatpush1.msra.mxu0 0.0
      %699 = vmatprep.subr.mxu0 0.0
      %700 = vmatpush1.msra.mxu0 0.0
      %701 = vmatprep.subr.mxu0 0.0
      %702 = vmatpush1.msra.mxu0 0.0
      %703 = vmatprep.subr.mxu0 0.0
      %704 = vmatpush1.msra.mxu0 0.0
      %705 = vmatprep.subr.mxu0 0.0
      %706 = vmatpush1.msra.mxu0 0.0
      %707 = vmatprep.subr.mxu0 0.0
      %708 = vmatpush1.msra.mxu0 0.0
      %709 = vmatprep.subr.mxu0 0.0
      %710 = vmatpush1.msra.mxu0 0.0
      %711 = vmatprep.subr.mxu0 0.0
      %712 = vmatpush1.msra.mxu0 0.0
      %713 = vmatprep.subr.mxu0 0.0
      %714 = vmatpush1.msra.mxu0 0.0
      %715 = vmatprep.subr.mxu0 0.0
      %716 = vmatpush1.msra.mxu0 0.0
      %717 = vmatprep.subr.mxu0 0.0
      %718 = vmatpush1.msra.mxu0 0.0
      %719 = vmatprep.subr.mxu0 0.0
      %720 = vmatpush1.msra.mxu0 0.0
      %721 = vmatprep.subr.mxu0 0.0
      %722 = vmatpush1.msra.mxu0 0.0
      %723 = vmatprep.subr.mxu0 0.0
      %724 = vmatpush1.msra.mxu0 0.0
      %725 = vmatprep.subr.mxu0 0.0
      %726 = vmatpush1.msra.mxu0 0.0
      %727 = vmatprep.subr.mxu0 0.0
      %728 = vmatpush1.msra.mxu0 0.0
      %729 = vmatprep.subr.mxu0 0.0
      %730 = vmatpush1.msra.mxu0 0.0
      %731 = vmatprep.subr.mxu0 0.0
      %732 = vmatpush1.msra.mxu0 0.0
      %733 = vmatprep.subr.mxu0 0.0
      %734 = vmatpush1.msra.mxu0 0.0
      %735 = vmatprep.subr.mxu0 0.0
      %736 = vmatpush1.msra.mxu0 0.0
      %737 = vmatprep.subr.mxu0 0.0
      %738 = vmatpush1.msra.mxu0 0.0
      %739 = vmatprep.subr.mxu0 0.0
      %740 = vmatpush1.msra.mxu0 0.0
      %741 = vmatprep.subr.mxu0 0.0
      %742 = vmatpush1.msra.mxu0 0.0
      %743 = vmatprep.subr.mxu0 0.0
      %744 = vmatpush1.msra.mxu0 0.0
      %745 = vmatprep.mubr.f32.mxu0 0.0
      %746 = vmatmul.mubr.f32.gmra.mrb[0].mxu0 %v679
      %v747 = vpop.f32.mrb[0].mxu0
      %v748 = vadd.f32 %v676, %v747
      %v749 = vpop.f32.mrb[0].mxu0
      %750 = vdwg.mxu0
      %v751 = vmax.f32 %v748, 0.0
      %v752 = vld [vmem:[%s5] sm:$0xff]
      %v753 = vld [vmem:[%s5 + $0x8] sm:$0xff]
      %v754 = vld [vmem:[%s5 + $0x10] sm:$0xff]
      %v755 = vld [vmem:[%s5 + $0x18] sm:$0xff]
      %v756 = vld [vmem:[%s6] sm:$0x1]
      %vm757 = vcmask 261120
      %v759 = vsel %vm757, %v751, 0
      %761 = vmatprep.subr.mxu0 0.0
      %762 = vmatpush1.msra.mxu0 %v752
      %763 = vmatprep.subr.mxu0 0.0
      %764 = vmatpush1.msra.mxu0 %v753
      %765 = vmatprep.subr.mxu0 0.0
      %766 = vmatpush1.msra.mxu0 %v754
      %767 = vmatprep.subr.mxu0 0.0
      %768 = vmatpush1.msra.mxu0 %v755
      %769 = vmatprep.subr.mxu0 0.0
      %770 = vmatpush1.msra.mxu0 0.0
      %771 = vmatprep.subr.mxu0 0.0
      %772 = vmatpush1.msra.mxu0 0.0
      %773 = vmatprep.subr.mxu0 0.0
      %774 = vmatpush1.msra.mxu0 0.0
      %775 = vmatprep.subr.mxu0 0.0
      %776 = vmatpush1.msra.mxu0 0.0
      %777 = vmatprep.subr.mxu0 0.0
      %778 = vmatpush1.msra.mxu0 0.0
      %779 = vmatprep.subr.mxu0 0.0
      %780 = vmatpush1.msra.mxu0 0.0
      %781 = vmatprep.subr.mxu0 0.0
      %782 = vmatpush1.msra.mxu0 0.0
      %783 = vmatprep.subr.mxu0 0.0
      %784 = vmatpush1.msra.mxu0 0.0
      %785 = vmatprep.subr.mxu0 0.0
      %786 = vmatpush1.msra.mxu0 0.0
      %787 = vmatprep.subr.mxu0 0.0
      %788 = vmatpush1.msra.mxu0 0.0
      %789 = vmatprep.subr.mxu0 0.0
      %790 = vmatpush1.msra.mxu0 0.0
      %791 = vmatprep.subr.mxu0 0.0
      %792 = vmatpush1.msra.mxu0 0.0
      %793 = vmatprep.subr.mxu0 0.0
      %794 = vmatpush1.msra.mxu0 0.0
      %795 = vmatprep.subr.mxu0 0.0
      %796 = vmatpush1.msra.mxu0 0.0
      %797 = vmatprep.subr.mxu0 0.0
      %798 = vmatpush1.msra.mxu0 0.0
      %799 = vmatprep.subr.mxu0 0.0
      %800 = vmatpush1.msra.mxu0 0.0
      %801 = vmatprep.subr.mxu0 0.0
      %802 = vmatpush1.msra.mxu0 0.0
      %803 = vmatprep.subr.mxu0 0.0
      %804 = vmatpush1.msra.mxu0 0.0
      %805 = vmatprep.subr.mxu0 0.0
      %806 = vmatpush1.msra.mxu0 0.0
      %807 = vmatprep.subr.mxu0 0.0
      %808 = vmatpush1.msra.mxu0 0.0
      %809 = vmatprep.subr.mxu0 0.0
      %810 = vmatpush1.msra.mxu0 0.0
      %811 = vmatprep.subr.mxu0 0.0
      %812 = vmatpush1.msra.mxu0 0.0
      %813 = vmatprep.subr.mxu0 0.0
      %814 = vmatpush1.msra.mxu0 0.0
      %815 = vmatprep.subr.mxu0 0.0
      %816 = vmatpush1.msra.mxu0 0.0
      %817 = vmatprep.subr.mxu0 0.0
      %818 = vmatpush1.msra.mxu0 0.0
      %819 = vmatprep.subr.mxu0 0.0
      %820 = vmatpush1.msra.mxu0 0.0
      %821 = vmatprep.subr.mxu0 0.0
      %822 = vmatpush1.msra.mxu0 0.0
      %823 = vmatprep.subr.mxu0 0.0
      %824 = vmatpush1.msra.mxu0 0.0
      %825 = vmatprep.mubr.f32.mxu0 0.0
      %826 = vmatmul.mubr.f32.gmra.mrb[0].mxu0 %v759
      %v827 = vpop.f32.mrb[0].mxu0
      %v828 = vadd.f32 %v756, %v827
      %v829 = vpop.f32.mrb[0].mxu0
      %830 = vdwg.mxu0
      %v831 = vmax.f32 %v828, 0.0
      %v832 = vld [vmem:[%s7] sm:$0xff]
      %v833 = vld [vmem:[%s7 + $0x8] sm:$0xff]
      %v834 = vld [vmem:[%s7 + $0x10] sm:$0xff]
      %v835 = vld [vmem:[%s7 + $0x18] sm:$0xff]
      %v836 = vld [vmem:[%s7 + $0x20] sm:$0xff]
      %v837 = vld [vmem:[%s7 + $0x28] sm:$0xff]
      %v838 = vld [vmem:[%s7 + $0x30] sm:$0xff]
      %v839 = vld [vmem:[%s7 + $0x38] sm:$0xff]
      %v840 = vld [vmem:[%s7 + $0x40] sm:$0xff]
      %v841 = vld [vmem:[%s7 + $0x48] sm:$0xff]
      %v842 = vld [vmem:[%s7 + $0x50] sm:$0xff]
      %v843 = vld [vmem:[%s7 + $0x58] sm:$0xff]
      %v844 = vld [vmem:[%s7 + $0x60] sm:$0xff]
      %v845 = vld [vmem:[%s7 + $0x68] sm:$0xff]
      %v846 = vld [vmem:[%s7 + $0x70] sm:$0xff]
      %v847 = vld [vmem:[%s7 + $0x78] sm:$0xff]
      %v848 = vld [vmem:[%s7 + $0x80] sm:$0xff]
      %v849 = vld [vmem:[%s7 + $0x88] sm:$0xff]
      %v850 = vld [vmem:[%s7 + $0x90] sm:$0xff]
      %v851 = vld [vmem:[%s7 + $0x98] sm:$0xff]
      %v852 = vld [vmem:[%s7 + $0xa0] sm:$0xff]
      %v853 = vld [vmem:[%s7 + $0xa8] sm:$0xff]
      %v854 = vld [vmem:[%s7 + $0xb0] sm:$0xff]
      %v855 = vld [vmem:[%s7 + $0xb8] sm:$0xff]
      %v856 = vld [vmem:[%s7 + $0xc0] sm:$0xff]
      %v857 = vld [vmem:[%s7 + $0xc8] sm:$0xff]
      %v858 = vld [vmem:[%s7 + $0xd0] sm:$0xff]
      %v859 = vld [vmem:[%s7 + $0xd8] sm:$0xff]
      %v860 = vld [vmem:[%s7 + $0xe0] sm:$0xff]
      %v861 = vld [vmem:[%s7 + $0xe8] sm:$0xff]
      %v862 = vld [vmem:[%s7 + $0xf0] sm:$0xff]
      %v863 = vld [vmem:[%s7 + $0xf8] sm:$0xff]
      %v864 = vld [vmem:[%s7 + $0x100] sm:$0xff]
      %v865 = vld [vmem:[%s7 + $0x108] sm:$0xff]
      %v866 = vld [vmem:[%s7 + $0x110] sm:$0xff]
      %v867 = vld [vmem:[%s7 + $0x118] sm:$0xff]
      %v868 = vld [vmem:[%s7 + $0x120] sm:$0xff]
      %v869 = vld [vmem:[%s7 + $0x128] sm:$0xff]
      %v870 = vld [vmem:[%s7 + $0x130] sm:$0xff]
      %v871 = vld [vmem:[%s7 + $0x138] sm:$0xff]
      %v872 = vld [vmem:[%s7 + $0x140] sm:$0xff]
      %v873 = vld [vmem:[%s7 + $0x148] sm:$0xff]
      %v874 = vld [vmem:[%s7 + $0x150] sm:$0xff]
      %v875 = vld [vmem:[%s7 + $0x158] sm:$0xff]
      %v876 = vld [vmem:[%s7 + $0x160] sm:$0xff]
      %v877 = vld [vmem:[%s7 + $0x168] sm:$0xff]
      %v878 = vld [vmem:[%s7 + $0x170] sm:$0xff]
      %v879 = vld [vmem:[%s7 + $0x178] sm:$0xff]
      %v880 = vld [vmem:[%s8] sm:$0x3f]
      %v882 = vlaneseq
      %v883 = vshrl.u32 %v882, 7
      %v884 = vsub.s32 0, %v883
      %v885 = vrot.slane %v880, %v884
      %v886 = vlaneseq
      %v887 = vshrl.u32 %v886, 7
      %v888 = vsub.s32 1, %v887
      %v889 = vrot.slane %v880, %v888
      %v890 = vlaneseq
      %v891 = vshrl.u32 %v890, 7
      %v892 = vsub.s32 2, %v891
      %v893 = vrot.slane %v880, %v892
      %v894 = vlaneseq
      %v895 = vshrl.u32 %v894, 7
      %v896 = vsub.s32 3, %v895
      %v897 = vrot.slane %v880, %v896
      %v898 = vlaneseq
      %v899 = vshrl.u32 %v898, 7
      %v900 = vsub.s32 4, %v899
      %v901 = vrot.slane %v880, %v900
      %v902 = vlaneseq
      %v903 = vshrl.u32 %v902, 7
      %v904 = vsub.s32 5, %v903
      %v905 = vrot.slane %v880, %v904
      %v913 = vsel %vm677, %v831, 0
      %915 = vmatprep.subr.mxu0 %v833
      %916 = vmatpush1.msra.mxu0 %v832
      %917 = vmatprep.subr.mxu0 %v839
      %918 = vmatpush1.msra.mxu0 %v838
      %919 = vmatprep.subr.mxu0 %v845
      %920 = vmatpush1.msra.mxu0 %v844
      %921 = vmatprep.subr.mxu0 %v851
      %922 = vmatpush1.msra.mxu0 %v850
      %923 = vmatprep.subr.mxu0 %v857
      %924 = vmatpush1.msra.mxu0 %v856
      %925 = vmatprep.subr.mxu0 %v863
      %926 = vmatpush1.msra.mxu0 %v862
      %927 = vmatprep.subr.mxu0 %v869
      %928 = vmatpush1.msra.mxu0 %v868
      %929 = vmatprep.subr.mxu0 %v875
      %930 = vmatpush1.msra.mxu0 %v874
      %931 = vmatprep.subr.mxu0 0.0
      %932 = vmatpush1.msra.mxu0 0.0
      %933 = vmatprep.subr.mxu0 0.0
      %934 = vmatpush1.msra.mxu0 0.0
      %935 = vmatprep.subr.mxu0 0.0
      %936 = vmatpush1.msra.mxu0 0.0
      %937 = vmatprep.subr.mxu0 0.0
      %938 = vmatpush1.msra.mxu0 0.0
      %939 = vmatprep.subr.mxu0 0.0
      %940 = vmatpush1.msra.mxu0 0.0
      %941 = vmatprep.subr.mxu0 0.0
      %942 = vmatpush1.msra.mxu0 0.0
      %943 = vmatprep.subr.mxu0 0.0
      %944 = vmatpush1.msra.mxu0 0.0
      %945 = vmatprep.subr.mxu0 0.0
      %946 = vmatpush1.msra.mxu0 0.0
      %947 = vmatprep.subr.mxu0 0.0
      %948 = vmatpush1.msra.mxu0 0.0
      %949 = vmatprep.subr.mxu0 0.0
      %950 = vmatpush1.msra.mxu0 0.0
      %951 = vmatprep.subr.mxu0 0.0
      %952 = vmatpush1.msra.mxu0 0.0
      %953 = vmatprep.subr.mxu0 0.0
      %954 = vmatpush1.msra.mxu0 0.0
      %955 = vmatprep.subr.mxu0 0.0
      %956 = vmatpush1.msra.mxu0 0.0
      %957 = vmatprep.subr.mxu0 0.0
      %958 = vmatpush1.msra.mxu0 0.0
      %959 = vmatprep.subr.mxu0 0.0
      %960 = vmatpush1.msra.mxu0 0.0
      %961 = vmatprep.subr.mxu0 0.0
      %962 = vmatpush1.msra.mxu0 0.0
      %963 = vmatprep.subr.mxu0 0.0
      %964 = vmatpush1.msra.mxu0 0.0
      %965 = vmatprep.subr.mxu0 0.0
      %966 = vmatpush1.msra.mxu0 0.0
      %967 = vmatprep.subr.mxu0 0.0
      %968 = vmatpush1.msra.mxu0 0.0
      %969 = vmatprep.subr.mxu0 0.0
      %970 = vmatpush1.msra.mxu0 0.0
      %971 = vmatprep.subr.mxu0 0.0
      %972 = vmatpush1.msra.mxu0 0.0
      %973 = vmatprep.subr.mxu0 0.0
      %974 = vmatpush1.msra.mxu0 0.0
      %975 = vmatprep.subr.mxu0 0.0
      %976 = vmatpush1.msra.mxu0 0.0
      %977 = vmatprep.subr.mxu0 0.0
      %978 = vmatpush1.msra.mxu0 0.0
      %979 = vmatprep.mubr.f32.mxu0 0.0
      %980 = vmatmul.mubr.f32.gmra.mrb[0].mxu0 %v913
      %v981 = vpop.f32.mrb[0].mxu0
      %v982 = vadd.f32 %v885, %v981
      %v983 = vpop.f32.mrb[0].mxu0
      %v984 = vadd.f32 %v889, %v983
      %985 = vdwg.mxu0
      %986 = vmatprep.subr.mxu0 %v835
      %987 = vmatpush1.msra.mxu0 %v834
      %988 = vmatprep.subr.mxu0 %v841
      %989 = vmatpush1.msra.mxu0 %v840
      %990 = vmatprep.subr.mxu0 %v847
      %991 = vmatpush1.msra.mxu0 %v846
      %992 = vmatprep.subr.mxu0 %v853
      %993 = vmatpush1.msra.mxu0 %v852
      %994 = vmatprep.subr.mxu0 %v859
      %995 = vmatpush1.msra.mxu0 %v858
      %996 = vmatprep.subr.mxu0 %v865
      %997 = vmatpush1.msra.mxu0 %v864
      %998 = vmatprep.subr.mxu0 %v871
      %999 = vmatpush1.msra.mxu0 %v870
      %1000 = vmatprep.subr.mxu0 %v877
      %1001 = vmatpush1.msra.mxu0 %v876
      %1002 = vmatprep.subr.mxu0 0.0
      %1003 = vmatpush1.msra.mxu0 0.0
      %1004 = vmatprep.subr.mxu0 0.0
      %1005 = vmatpush1.msra.mxu0 0.0
      %1006 = vmatprep.subr.mxu0 0.0
      %1007 = vmatpush1.msra.mxu0 0.0
      %1008 = vmatprep.subr.mxu0 0.0
      %1009 = vmatpush1.msra.mxu0 0.0
      %1010 = vmatprep.subr.mxu0 0.0
      %1011 = vmatpush1.msra.mxu0 0.0
      %1012 = vmatprep.subr.mxu0 0.0
      %1013 = vmatpush1.msra.mxu0 0.0
      %1014 = vmatprep.subr.mxu0 0.0
      %1015 = vmatpush1.msra.mxu0 0.0
      %1016 = vmatprep.subr.mxu0 0.0
      %1017 = vmatpush1.msra.mxu0 0.0
      %1018 = vmatprep.subr.mxu0 0.0
      %1019 = vmatpush1.msra.mxu0 0.0
      %1020 = vmatprep.subr.mxu0 0.0
      %1021 = vmatpush1.msra.mxu0 0.0
      %1022 = vmatprep.subr.mxu0 0.0
      %1023 = vmatpush1.msra.mxu0 0.0
      %1024 = vmatprep.subr.mxu0 0.0
      %1025 = vmatpush1.msra.mxu0 0.0
      %1026 = vmatprep.subr.mxu0 0.0
      %1027 = vmatpush1.msra.mxu0 0.0
      %1028 = vmatprep.subr.mxu0 0.0
      %1029 = vmatpush1.msra.mxu0 0.0
      %1030 = vmatprep.subr.mxu0 0.0
      %1031 = vmatpush1.msra.mxu0 0.0
      %1032 = vmatprep.subr.mxu0 0.0
      %1033 = vmatpush1.msra.mxu0 0.0
      %1034 = vmatprep.subr.mxu0 0.0
      %1035 = vmatpush1.msra.mxu0 0.0
      %1036 = vmatprep.subr.mxu0 0.0
      %1037 = vmatpush1.msra.mxu0 0.0
      %1038 = vmatprep.subr.mxu0 0.0
      %1039 = vmatpush1.msra.mxu0 0.0
      %1040 = vmatprep.subr.mxu0 0.0
      %1041 = vmatpush1.msra.mxu0 0.0
      %1042 = vmatprep.subr.mxu0 0.0
      %1043 = vmatpush1.msra.mxu0 0.0
      %1044 = vmatprep.subr.mxu0 0.0
      %1045 = vmatpush1.msra.mxu0 0.0
      %1046 = vmatprep.subr.mxu0 0.0
      %1047 = vmatpush1.msra.mxu0 0.0
      %1048 = vmatprep.subr.mxu0 0.0
      %1049 = vmatpush1.msra.mxu0 0.0
      %1050 = vmatprep.mubr.f32.mxu0 0.0
      %1051 = vmatmul.mubr.f32.gmra.mrb[0].mxu0 %v913
      %v1052 = vpop.f32.mrb[0].mxu0
      %v1053 = vadd.f32 %v893, %v1052
      %v1054 = vpop.f32.mrb[0].mxu0
      %v1055 = vadd.f32 %v897, %v1054
      %1056 = vdwg.mxu0
      %1057 = vmatprep.subr.mxu0 %v837
      %1058 = vmatpush1.msra.mxu0 %v836
      %1059 = vmatprep.subr.mxu0 %v843
      %1060 = vmatpush1.msra.mxu0 %v842
      %1061 = vmatprep.subr.mxu0 %v849
      %1062 = vmatpush1.msra.mxu0 %v848
      %1063 = vmatprep.subr.mxu0 %v855
      %1064 = vmatpush1.msra.mxu0 %v854
      %1065 = vmatprep.subr.mxu0 %v861
      %1066 = vmatpush1.msra.mxu0 %v860
      %1067 = vmatprep.subr.mxu0 %v867
      %1068 = vmatpush1.msra.mxu0 %v866
      %1069 = vmatprep.subr.mxu0 %v873
      %1070 = vmatpush1.msra.mxu0 %v872
      %1071 = vmatprep.subr.mxu0 %v879
      %1072 = vmatpush1.msra.mxu0 %v878
      %1073 = vmatprep.subr.mxu0 0.0
      %1074 = vmatpush1.msra.mxu0 0.0
      %1075 = vmatprep.subr.mxu0 0.0
      %1076 = vmatpush1.msra.mxu0 0.0
      %1077 = vmatprep.subr.mxu0 0.0
      %1078 = vmatpush1.msra.mxu0 0.0
      %1079 = vmatprep.subr.mxu0 0.0
      %1080 = vmatpush1.msra.mxu0 0.0
      %1081 = vmatprep.subr.mxu0 0.0
      %1082 = vmatpush1.msra.mxu0 0.0
      %1083 = vmatprep.subr.mxu0 0.0
      %1084 = vmatpush1.msra.mxu0 0.0
      %1085 = vmatprep.subr.mxu0 0.0
      %1086 = vmatpush1.msra.mxu0 0.0
      %1087 = vmatprep.subr.mxu0 0.0
      %1088 = vmatpush1.msra.mxu0 0.0
      %1089 = vmatprep.subr.mxu0 0.0
      %1090 = vmatpush1.msra.mxu0 0.0
      %1091 = vmatprep.subr.mxu0 0.0
      %1092 = vmatpush1.msra.mxu0 0.0
      %1093 = vmatprep.subr.mxu0 0.0
      %1094 = vmatpush1.msra.mxu0 0.0
      %1095 = vmatprep.subr.mxu0 0.0
      %1096 = vmatpush1.msra.mxu0 0.0
      %1097 = vmatprep.subr.mxu0 0.0
      %1098 = vmatpush1.msra.mxu0 0.0
      %1099 = vmatprep.subr.mxu0 0.0
      %1100 = vmatpush1.msra.mxu0 0.0
      %1101 = vmatprep.subr.mxu0 0.0
      %1102 = vmatpush1.msra.mxu0 0.0
      %1103 = vmatprep.subr.mxu0 0.0
      %1104 = vmatpush1.msra.mxu0 0.0
      %1105 = vmatprep.subr.mxu0 0.0
      %1106 = vmatpush1.msra.mxu0 0.0
      %1107 = vmatprep.subr.mxu0 0.0
      %1108 = vmatpush1.msra.mxu0 0.0
      %1109 = vmatprep.subr.mxu0 0.0
      %1110 = vmatpush1.msra.mxu0 0.0
      %1111 = vmatprep.subr.mxu0 0.0
      %1112 = vmatpush1.msra.mxu0 0.0
      %1113 = vmatprep.subr.mxu0 0.0
      %1114 = vmatpush1.msra.mxu0 0.0
      %1115 = vmatprep.subr.mxu0 0.0
      %1116 = vmatpush1.msra.mxu0 0.0
      %1117 = vmatprep.subr.mxu0 0.0
      %1118 = vmatpush1.msra.mxu0 0.0
      %1119 = vmatprep.subr.mxu0 0.0
      %1120 = vmatpush1.msra.mxu0 0.0
      %1121 = vmatprep.mubr.f32.mxu0 0.0
      %1122 = vmatmul.mubr.f32.gmra.mrb[0].mxu0 %v913
      %v1123 = vpop.f32.mrb[0].mxu0
      %v1124 = vadd.f32 %v901, %v1123
      %v1125 = vpop.f32.mrb[0].mxu0
      %v1126 = vadd.f32 %v905, %v1125
      %1127 = vdwg.mxu0
      %v1128 = vsub.f32 0.0, %v982
      %v1129 = vsub.f32 0.0, %v984
      %v1130 = vsub.f32 0.0, %v1053
      %v1131 = vsub.f32 0.0, %v1055
      %v1132 = vsub.f32 0.0, %v1124
      %v1133 = vsub.f32 0.0, %v1126
      %v1134 = vmul.f32 %v1128, 1.442695
      %v1135 = vpow.pop %v1134
      %v1136 = vmul.f32 %v1129, 1.442695
      %v1137 = vpow.pop %v1136
      %v1138 = vmul.f32 %v1130, 1.442695
      %v1139 = vpow.pop %v1138
      %v1140 = vmul.f32 %v1131, 1.442695
      %v1141 = vpow.pop %v1140
      %v1142 = vmul.f32 %v1132, 1.442695
      %v1143 = vpow.pop %v1142
      %v1144 = vmul.f32 %v1133, 1.442695
      %v1145 = vpow.pop %v1144
      %v1146 = vadd.f32 %v1135, 1.0
      %v1147 = vadd.f32 %v1137, 1.0
      %v1148 = vadd.f32 %v1139, 1.0
      %v1149 = vadd.f32 %v1141, 1.0
      %v1150 = vadd.f32 %v1143, 1.0
      %v1151 = vadd.f32 %v1145, 1.0
      %v1152 = vrcp.pop %v1146
      %v1153 = vrcp.pop %v1147
      %v1154 = vrcp.pop %v1148
      %v1155 = vrcp.pop %v1149
      %v1156 = vrcp.pop %v1150
      %v1157 = vrcp.pop %v1151
      %v1164 = vcombine.low %v1152, %v1153
      %v1165 = vcombine.low %v1154, %v1155
      %v1166 = vcombine.low %v1156, %v1157
      %v1168 = vunpack.c.l.s4 1966171168
      %v1169 = vunpack.c.0.s8 %v1168
      %v1170 = vlaneseq
      %v1171 = vshrl.u32 %v1170, 7
      %v1172 = vsub.s32 %v1169, %v1171
      %v1173 = vrot.slane %v1164, %v1172
      %v1175 = vunpack.c.l.s4 1966171168
      %v1176 = vunpack.c.0.s8 %v1175
      %v1177 = vlaneseq
      %v1178 = vshrl.u32 %v1177, 7
      %v1179 = vsub.s32 %v1176, %v1178
      %v1180 = vrot.slane %v1165, %v1179
      %v1182 = vunpack.c.l.s4 1966171168
      %v1183 = vunpack.c.0.s8 %v1182
      %v1184 = vlaneseq
      %v1185 = vshrl.u32 %v1184, 7
      %v1186 = vsub.s32 %v1183, %v1185
      %v1187 = vrot.slane %v1166, %v1186
      %v1188 = vcombine.low %v1173, %v1180
      %v1190 = vunpack.c.l.s4 1966171168
      %v1191 = vunpack.c.0.s8 %v1190
      %v1192 = vlaneseq
      %v1193 = vshrl.u32 %v1192, 7
      %v1194 = vsub.s32 %v1191, %v1193
      %v1195 = vrot.slane %v1188, %v1194
      %v1197 = vunpack.c.l.s4 1966171168
      %v1198 = vunpack.c.0.s8 %v1197
      %v1199 = vlaneseq
      %v1200 = vshrl.u32 %v1199, 7
      %v1201 = vsub.s32 %v1198, %v1200
      %v1202 = vrot.slane %v1187, %v1201
      %v1203 = vcombine.low %v1195, %v1202
      %v1205 = vlaneseq
      %vm1206 = vcmp.ge.s32.totalorder %v1205, 0
      %vm1207 = vcmp.lt.s32.totalorder %v1205, 768
      %vm1208 = vmand %vm1206, %vm1207
      %1209 = vst.msk [vmem:[%s327] sm:$0x3f] %vm1208, %v1203
      %p1210 = scmp.lt.s32.totalorder %s20, 1
      %s1211 = scalar_select %p1210, %s20, 1
      %s1212 = smul.addr %s1211, 6
      %s1213 = scalar_lea.vmem %s9, %s1212
      // Predicated region
      $region57: #{autoencoder_forward.1} parent=55 // pred_check
        %p1214 = pneg %p232
      $region58: #{autoencoder_forward.1} parent=55 // pred_check_branch
        %1216 = sbr.rel (%p1214) target = $region60
      $region59: #{autoencoder_forward.1} parent=55 // pred_region
        _
      $region60: #{autoencoder_forward.1} parent=55 // pred_fallthru
        _
    $region56: #{autoencoder_forward.1} parent=5 // pred_fallthru
      _
    %p1217 = scmp.le.s32.totalorder 2, %s15
    // Predicated region
    $region61: #{autoencoder_forward.1} parent=5 // pred_check
      %p1218 = pneg %p1217
    $region62: #{autoencoder_forward.1} parent=5 // pred_check_branch
      %1220 = sbr.rel (%p1218) target = $region64
    $region63: #{autoencoder_forward.1} parent=5 // pred_region
      %s1221 = ssub.s32 %s15, 2
      // Predicated region
      $region65: #{autoencoder_forward.1} parent=63 // pred_check
        %p1222 = pneg %p238
      $region66: #{autoencoder_forward.1} parent=63 // pred_check_branch
        %1224 = sbr.rel (%p1222) target = $region68
      $region67: #{autoencoder_forward.1} parent=63 // pred_region
        %p1225 = scmp.lt.s32.totalorder %s21, 1
        %s1226 = scalar_select %p1225, %s21, 1
        %s1227 = smul.addr %s1226, 6
        %s1228 = scalar_lea.vmem %s9, %s1227
      $region68: #{autoencoder_forward.1} parent=63 // pred_fallthru
        _
    $region64: #{autoencoder_forward.1} parent=5 // pred_fallthru
      _
  $region6: #{autoencoder_forward.1} parent=0 // loop_footer
    %s19 = sadd.s32 1, %s15
  $region7: #{autoencoder_forward.1} parent=0 // loop_footer_branch
    %14 = sbr.rel target = $region3
  $region8: #{autoencoder_forward.1} parent=0 // loop_exit
    _

</llo_original>
